<compile_context>
chip_gen: v6e
topology: v6e:2x2x1
jax: 0.10.0
libtpu: 0.0.40
codegen_flags: <defaults>
</compile_context>

<pallas_src>
import numpy as np
import jax
import jax.numpy as jnp
from jax.experimental import pallas as pl
from jax.experimental.pallas import tpu as pltpu


def _mu_kernel(xT_ref, w1_ref, b1_ref, w2_ref, b2_ref, w3_ref, b3_ref, o_ref):
    # xT_ref: [state_dim, TB] bf16, weights bf16 [out, in], biases f32 [out, 1].
    # Matmuls -> MXU (bf16 operands, f32 accumulation), ReLU -> VPU, tanh -> EUP.
    x = xT_ref[...]
    h1 = jnp.dot(w1_ref[...], x, preferred_element_type=jnp.float32) + b1_ref[...]
    h1 = jnp.maximum(h1, 0.0)
    h2 = jnp.dot(w2_ref[...], h1.astype(jnp.bfloat16),
                 preferred_element_type=jnp.float32) + b2_ref[...]
    h2 = jnp.maximum(h2, 0.0)
    y = jnp.dot(w3_ref[...], h2.astype(jnp.bfloat16),
                preferred_element_type=jnp.float32) + b3_ref[...]
    o_ref[...] = jnp.tanh(y).astype(o_ref.dtype)


def mu_estimator_pallas(state, params, *, tb=2048):
    """state: [B, state_dim] f32; params: dict of f32 w1,b1,w2,b2,w3,b3
    with weights [out_features, in_features] and biases [out_features, 1].
    Returns [B, action_dim] f32."""
    w1, b1, w2, b2, w3, b3 = (params[k] for k in ("w1", "b1", "w2", "b2", "w3", "b3"))
    B, state_dim = state.shape
    fc1 = w1.shape[0]
    fc2 = w2.shape[0]
    action_dim = w3.shape[0]

    # Lane tile over the batch axis: either a multiple of 128 (lane width) or
    # the full batch extent — both satisfy the (8,128) BlockSpec rule.
    tb = max(128, (tb // 128) * 128)
    TB = B if B <= tb else tb
    grid = (pl.cdiv(B, TB),)

    # Transpose batch onto the lane axis and cast matmul operands to bf16.
    xT = state.T.astype(jnp.bfloat16)                      # [state_dim, B]
    w1b, w2b, w3b = (w.astype(jnp.bfloat16) for w in (w1, w2, w3))

    in_specs = [
        pl.BlockSpec((state_dim, TB), lambda i: (0, i)),   # streamed activations
        pl.BlockSpec((fc1, state_dim), lambda i: (0, 0)),  # VMEM-resident weights
        pl.BlockSpec((fc1, 1), lambda i: (0, 0)),
        pl.BlockSpec((fc2, fc1), lambda i: (0, 0)),
        pl.BlockSpec((fc2, 1), lambda i: (0, 0)),
        pl.BlockSpec((action_dim, fc2), lambda i: (0, 0)),
        pl.BlockSpec((action_dim, 1), lambda i: (0, 0)),
    ]
    out_spec = pl.BlockSpec((action_dim, TB), lambda i: (0, i))

    weight_bytes = (2 * (state_dim * fc1 + fc1 * fc2 + fc2 * action_dim)   # bf16 W
                    + 4 * (fc1 + fc2 + action_dim))                        # f32 b
    cost = pl.CostEstimate(
        flops=2 * B * (state_dim * fc1 + fc1 * fc2 + fc2 * action_dim),
        transcendentals=B * action_dim,
        bytes_accessed=2 * B * state_dim + 4 * B * action_dim + weight_bytes,
    )

    outT = pl.pallas_call(
        _mu_kernel,
        out_shape=jax.ShapeDtypeStruct((action_dim, B), jnp.float32),
        grid_spec=pltpu.PrefetchScalarGridSpec(
            num_scalar_prefetch=0,
            grid=grid,
            in_specs=in_specs,
            out_specs=out_spec,
        ),
        compiler_params=pltpu.CompilerParams(
            dimension_semantics=("parallel",),
        ),
        cost_estimate=cost,
    )(xT, w1b, b1, w2b, b2, w3b, b3)

    return outT.T                                          # [B, action_dim]


def init_params(key, state_dim, action_dim, fc1=64, fc2=64):
    """PyTorch-style uniform(+/-1/sqrt(fan_in)) init.
    Weights stored [out_features, in_features], biases [out_features, 1]."""
    ks = jax.random.split(key, 6)

    def lin(kw, kb, fan_in, fan_out):
        bound = 1.0 / np.sqrt(fan_in)
        w = jax.random.uniform(kw, (fan_out, fan_in), jnp.float32, -bound, bound)
        b = jax.random.uniform(kb, (fan_out, 1), jnp.float32, -bound, bound)
        return w, b

    w1, b1 = lin(ks[0], ks[1], state_dim, fc1)
    w2, b2 = lin(ks[2], ks[3], fc1, fc2)
    w3, b3 = lin(ks[4], ks[5], fc2, action_dim)
    return dict(w1=w1, b1=b1, w2=w2, b2=b2, w3=w3, b3=b3)


def mu_estimator_ref(state, p):
    # Pure-JAX f32 reference (weights are [out, in], biases [out, 1]).
    h1 = jnp.maximum(state @ p["w1"].T + p["b1"].T, 0.0)
    h2 = jnp.maximum(h1 @ p["w2"].T + p["b2"].T, 0.0)
    return jnp.tanh(h2 @ p["w3"].T + p["b3"].T)


if __name__ == "__main__":
    key = jax.random.PRNGKey(0)
    k_state, k_params = jax.random.split(key)

    # Small shapes consistent with the module.
    B, state_dim, action_dim = 2, 8, 4
    params = init_params(k_params, state_dim, action_dim, fc1=64, fc2=64)
    state = jax.random.normal(k_state, (B, state_dim), jnp.float32)

    out = jax.block_until_ready(mu_estimator_pallas(state, params))
    ref = mu_estimator_ref(state, params)
    # bf16 matmul operands (f32 accumulation) => ~1e-3 level differences.
    np.testing.assert_allclose(np.asarray(out), np.asarray(ref), rtol=2e-2, atol=2e-2)

    # Exercise the multi-tile path with a partial (non-multiple-of-TB) last block.
    big_state = jax.random.normal(k_state, (2050, state_dim), jnp.float32)
    big_out = jax.block_until_ready(mu_estimator_pallas(big_state, params, tb=2048))
    np.testing.assert_allclose(np.asarray(big_out),
                               np.asarray(mu_estimator_ref(big_state, params)),
                               rtol=2e-2, atol=2e-2)

    print("KERNEL_OK")
</pallas_src>

<mosaic_0001>
module attributes {stable_mosaic.version = 11 : i64} {
  func.func @_mu_kernel(%arg0: i32, %arg1: memref<8x2xbf16, #tpu.memory_space<vmem>>, %arg2: memref<64x8xbf16, #tpu.memory_space<vmem>>, %arg3: memref<64x1xf32, #tpu.memory_space<vmem>>, %arg4: memref<64x64xbf16, #tpu.memory_space<vmem>>, %arg5: memref<64x1xf32, #tpu.memory_space<vmem>>, %arg6: memref<4x64xbf16, #tpu.memory_space<vmem>>, %arg7: memref<4x1xf32, #tpu.memory_space<vmem>>, %arg8: memref<4x2xf32, #tpu.memory_space<vmem>>) attributes {dimension_semantics = [#tpu.dimension_semantics<parallel>], iteration_bounds = array<i64: 1>, scalar_prefetch = 0 : i64, scratch_operands = 0 : i64, tpu.core_type = #tpu.core_type<tc>, window_params = [{transform_indices = @transform_0, window_bounds = array<i64: 8, 2>}, {pipeline_mode = #tpu.pipeline_mode<synchronous>, transform_indices = @transform_1, window_bounds = array<i64: 64, 8>}, {pipeline_mode = #tpu.pipeline_mode<synchronous>, transform_indices = @transform_2, window_bounds = array<i64: 64, 1>}, {pipeline_mode = #tpu.pipeline_mode<synchronous>, transform_indices = @transform_3, window_bounds = array<i64: 64, 64>}, {pipeline_mode = #tpu.pipeline_mode<synchronous>, transform_indices = @transform_4, window_bounds = array<i64: 64, 1>}, {pipeline_mode = #tpu.pipeline_mode<synchronous>, transform_indices = @transform_5, window_bounds = array<i64: 4, 64>}, {pipeline_mode = #tpu.pipeline_mode<synchronous>, transform_indices = @transform_6, window_bounds = array<i64: 4, 1>}, {transform_indices = @transform_7, window_bounds = array<i64: 4, 2>}]} {
    %c0 = arith.constant 0 : index
    %c0_0 = arith.constant 0 : index
    %0 = vector.load %arg1[%c0, %c0_0] : memref<8x2xbf16, #tpu.memory_space<vmem>>, vector<8x2xbf16>
    %c0_1 = arith.constant 0 : index
    %c0_2 = arith.constant 0 : index
    %1 = vector.load %arg2[%c0_1, %c0_2] : memref<64x8xbf16, #tpu.memory_space<vmem>>, vector<64x8xbf16>
    %cst = arith.constant dense<0.000000e+00> : vector<64x2xf32>
    %2 = tpu.matmul %1, %0, %cst {dimension_numbers = #tpu.dot_dimension_numbers<[1], [0], [0], [1], [0, 0, 1, 1], [], []>} : vector<64x8xbf16>, vector<8x2xbf16>, vector<64x2xf32> -> vector<64x2xf32>
    %c0_3 = arith.constant 0 : index
    %c0_4 = arith.constant 0 : index
    %3 = vector.load %arg3[%c0_3, %c0_4] : memref<64x1xf32, #tpu.memory_space<vmem>>, vector<64x1xf32>
    %4 = vector.broadcast %3 : vector<64x1xf32> to vector<64x2xf32>
    %5 = arith.addf %2, %4 : vector<64x2xf32>
    %cst_5 = arith.constant 0.000000e+00 : f32
    %6 = vector.broadcast %cst_5 : f32 to vector<64x2xf32>
    %7 = arith.maximumf %5, %6 : vector<64x2xf32>
    %c0_6 = arith.constant 0 : index
    %c0_7 = arith.constant 0 : index
    %8 = vector.load %arg4[%c0_6, %c0_7] : memref<64x64xbf16, #tpu.memory_space<vmem>>, vector<64x64xbf16>
    %9 = arith.truncf %7 : vector<64x2xf32> to vector<64x2xbf16>
    %cst_8 = arith.constant dense<0.000000e+00> : vector<64x2xf32>
    %10 = tpu.matmul %8, %9, %cst_8 {dimension_numbers = #tpu.dot_dimension_numbers<[1], [0], [0], [1], [0, 0, 1, 1], [], []>} : vector<64x64xbf16>, vector<64x2xbf16>, vector<64x2xf32> -> vector<64x2xf32>
    %c0_9 = arith.constant 0 : index
    %c0_10 = arith.constant 0 : index
    %11 = vector.load %arg5[%c0_9, %c0_10] : memref<64x1xf32, #tpu.memory_space<vmem>>, vector<64x1xf32>
    %12 = vector.broadcast %11 : vector<64x1xf32> to vector<64x2xf32>
    %13 = arith.addf %10, %12 : vector<64x2xf32>
    %cst_11 = arith.constant 0.000000e+00 : f32
    %14 = vector.broadcast %cst_11 : f32 to vector<64x2xf32>
    %15 = arith.maximumf %13, %14 : vector<64x2xf32>
    %c0_12 = arith.constant 0 : index
    %c0_13 = arith.constant 0 : index
    %16 = vector.load %arg6[%c0_12, %c0_13] : memref<4x64xbf16, #tpu.memory_space<vmem>>, vector<4x64xbf16>
    %17 = arith.truncf %15 : vector<64x2xf32> to vector<64x2xbf16>
    %cst_14 = arith.constant dense<0.000000e+00> : vector<4x2xf32>
    %18 = tpu.matmul %16, %17, %cst_14 {dimension_numbers = #tpu.dot_dimension_numbers<[1], [0], [0], [1], [0, 0, 1, 1], [], []>} : vector<4x64xbf16>, vector<64x2xbf16>, vector<4x2xf32> -> vector<4x2xf32>
    %c0_15 = arith.constant 0 : index
    %c0_16 = arith.constant 0 : index
    %19 = vector.load %arg7[%c0_15, %c0_16] : memref<4x1xf32, #tpu.memory_space<vmem>>, vector<4x1xf32>
    %20 = vector.broadcast %19 : vector<4x1xf32> to vector<4x2xf32>
    %21 = arith.addf %18, %20 : vector<4x2xf32>
    %22 = math.tanh %21 : vector<4x2xf32>
    %c0_17 = arith.constant 0 : index
    %c0_18 = arith.constant 0 : index
    %23 = vector.load %arg8[%c0_17, %c0_18] : memref<4x2xf32, #tpu.memory_space<vmem>>, vector<4x2xf32>
    tpu.vector_store %arg8[%c0_17, %c0_18], %22 {strides = array<i32>} : memref<4x2xf32, #tpu.memory_space<vmem>>, vector<4x2xf32>,
    return
  }
  func.func @transform_0(%arg0: i32) -> (i32, i32) {
    %c0_i32 = arith.constant 0 : i32
    %c0_i32_0 = arith.constant 0 : i32
    return %c0_i32, %arg0 : i32, i32
  }
  func.func @transform_1(%arg0: i32) -> (i32, i32) {
    %c0_i32 = arith.constant 0 : i32
    %c0_i32_0 = arith.constant 0 : i32
    %c0_i32_1 = arith.constant 0 : i32
    return %c0_i32, %c0_i32_0 : i32, i32
  }
  func.func @transform_2(%arg0: i32) -> (i32, i32) {
    %c0_i32 = arith.constant 0 : i32
    %c0_i32_0 = arith.constant 0 : i32
    %c0_i32_1 = arith.constant 0 : i32
    return %c0_i32, %c0_i32_0 : i32, i32
  }
  func.func @transform_3(%arg0: i32) -> (i32, i32) {
    %c0_i32 = arith.constant 0 : i32
    %c0_i32_0 = arith.constant 0 : i32
    %c0_i32_1 = arith.constant 0 : i32
    return %c0_i32, %c0_i32_0 : i32, i32
  }
  func.func @transform_4(%arg0: i32) -> (i32, i32) {
    %c0_i32 = arith.constant 0 : i32
    %c0_i32_0 = arith.constant 0 : i32
    %c0_i32_1 = arith.constant 0 : i32
    return %c0_i32, %c0_i32_0 : i32, i32
  }
  func.func @transform_5(%arg0: i32) -> (i32, i32) {
    %c0_i32 = arith.constant 0 : i32
    %c0_i32_0 = arith.constant 0 : i32
    %c0_i32_1 = arith.constant 0 : i32
    return %c0_i32, %c0_i32_0 : i32, i32
  }
  func.func @transform_6(%arg0: i32) -> (i32, i32) {
    %c0_i32 = arith.constant 0 : i32
    %c0_i32_0 = arith.constant 0 : i32
    %c0_i32_1 = arith.constant 0 : i32
    return %c0_i32, %c0_i32_0 : i32, i32
  }
  func.func @transform_7(%arg0: i32) -> (i32, i32) {
    %c0_i32 = arith.constant 0 : i32
    %c0_i32_0 = arith.constant 0 : i32
    return %c0_i32, %arg0 : i32, i32
  }
}

</mosaic_0001>

<llo_original>
// kernel: tpu_custom_call.1
$region0: #{tpu_custom_call.1}
  #allocation0 [shape = 'u32[]', space=smem, size = 0x4, offset = 0x4, fixed_abs, tag = 'smem constant byte address 0x4 - core index']
  #allocation1 [shape = 'u32[144,128]{1,0:T(1,128)}', space=vmem, size = 0x12000, scoped, tag = 'internal scratch']
  %s0 = inlined_call_operand.vmem [shape: bf16[8,2], index: 0, kind: input, shape index: {}]
  %s1 = inlined_call_operand.vmem [shape: bf16[64,8], index: 1, kind: input, shape index: {}]
  %s2 = inlined_call_operand.vmem [shape: f32[64,1], index: 2, kind: input, shape index: {}]
  %s3 = inlined_call_operand.vmem [shape: bf16[64,64], index: 3, kind: input, shape index: {}]
  %s4 = inlined_call_operand.vmem [shape: f32[64,1], index: 4, kind: input, shape index: {}]
  %s5 = inlined_call_operand.vmem [shape: bf16[4,64], index: 5, kind: input, shape index: {}]
  %s6 = inlined_call_operand.vmem [shape: f32[4,1], index: 6, kind: input, shape index: {}]
  %s7 = inlined_call_operand.vmem [shape: f32[4,2], index: 7, kind: output, shape index: {}]
  %s8 = sld [smem:[#allocation0]]
  $region38: #{tpu_custom_call.1} parent=0
    _
  %s10 = ssub.s32 1, %s8
  %s11 = scalar_select 0, %s10, %s8
  // Predicated region
  $region2: #{tpu_custom_call.1} parent=0 // pred_check
    _
  $region3: #{tpu_custom_call.1} parent=0 // pred_check_branch
    %13 = sbr.rel (0) target = $region5
  $region4: #{tpu_custom_call.1} parent=0 // pred_region
    _
  $region5: #{tpu_custom_call.1} parent=0 // pred_fallthru
    _
  // Predicated region
  $region6: #{tpu_custom_call.1} parent=0 // pred_check
    _
  $region7: #{tpu_custom_call.1} parent=0 // pred_check_branch
    %15 = sbr.rel (0) target = $region9
  $region8: #{tpu_custom_call.1} parent=0 // pred_region
    _
  $region9: #{tpu_custom_call.1} parent=0 // pred_fallthru
    _
  // Predicated region
  $region10: #{tpu_custom_call.1} parent=0 // pred_check
    _
  $region11: #{tpu_custom_call.1} parent=0 // pred_check_branch
    %17 = sbr.rel (0) target = $region13
  $region12: #{tpu_custom_call.1} parent=0 // pred_region
    _
  $region13: #{tpu_custom_call.1} parent=0 // pred_fallthru
    _
  // Predicated region
  $region14: #{tpu_custom_call.1} parent=0 // pred_check
    _
  $region15: #{tpu_custom_call.1} parent=0 // pred_check_branch
    %19 = sbr.rel (0) target = $region17
  $region16: #{tpu_custom_call.1} parent=0 // pred_region
    _
  $region17: #{tpu_custom_call.1} parent=0 // pred_fallthru
    _
  // Predicated region
  $region18: #{tpu_custom_call.1} parent=0 // pred_check
    _
  $region19: #{tpu_custom_call.1} parent=0 // pred_check_branch
    %21 = sbr.rel (0) target = $region21
  $region20: #{tpu_custom_call.1} parent=0 // pred_region
    _
  $region21: #{tpu_custom_call.1} parent=0 // pred_fallthru
    _
  // Predicated region
  $region22: #{tpu_custom_call.1} parent=0 // pred_check
    _
  $region23: #{tpu_custom_call.1} parent=0 // pred_check_branch
    %23 = sbr.rel (0) target = $region25
  $region24: #{tpu_custom_call.1} parent=0 // pred_region
    _
  $region25: #{tpu_custom_call.1} parent=0 // pred_fallthru
    _
  // Predicated region
  $region26: #{tpu_custom_call.1} parent=0 // pred_check
    _
  $region27: #{tpu_custom_call.1} parent=0 // pred_check_branch
    %25 = sbr.rel (0) target = $region29
  $region28: #{tpu_custom_call.1} parent=0 // pred_region
    _
  $region29: #{tpu_custom_call.1} parent=0 // pred_fallthru
    _
  %v27 = vld [vmem:[%s0] sm:$0xf]
  %v28 = vld [vmem:[%s1] sm:$0xf]
  %v29 = vld [vmem:[%s1 + $0x4] sm:$0xf]
  %v30 = vld [vmem:[%s1 + $0x8] sm:$0xf]
  %v31 = vld [vmem:[%s1 + $0xc] sm:$0xf]
  %v32 = vld [vmem:[%s1 + $0x10] sm:$0xf]
  %v33 = vld [vmem:[%s1 + $0x14] sm:$0xf]
  %v34 = vld [vmem:[%s1 + $0x18] sm:$0xf]
  %v35 = vld [vmem:[%s1 + $0x1c] sm:$0xf]
  %v36 = vld [vmem:[%s2] sm:$0xff]
  %v37 = vld [vmem:[%s2 + $0x8] sm:$0xff]
  %v38 = vld [vmem:[%s2 + $0x10] sm:$0xff]
  %v39 = vld [vmem:[%s2 + $0x18] sm:$0xff]
  %v40 = vld [vmem:[%s2 + $0x20] sm:$0xff]
  %v41 = vld [vmem:[%s2 + $0x28] sm:$0xff]
  %v42 = vld [vmem:[%s2 + $0x30] sm:$0xff]
  %v43 = vld [vmem:[%s2 + $0x38] sm:$0xff]
  %45 = vset.pattern.permute.xlu0 0
  %46 = vperm.xlu0 %45, %v36
  %v47 = vpop.permute.xlu0 %46
  %50 = vset.pattern.permute.xlu0 0
  %51 = vperm.xlu0 %50, %v37
  %v52 = vpop.permute.xlu0 %51
  %55 = vset.pattern.permute.xlu0 0
  %56 = vperm.xlu0 %55, %v38
  %v57 = vpop.permute.xlu0 %56
  %60 = vset.pattern.permute.xlu0 0
  %61 = vperm.xlu0 %60, %v39
  %v62 = vpop.permute.xlu0 %61
  %65 = vset.pattern.permute.xlu0 0
  %66 = vperm.xlu0 %65, %v40
  %v67 = vpop.permute.xlu0 %66
  %70 = vset.pattern.permute.xlu0 0
  %71 = vperm.xlu0 %70, %v41
  %v72 = vpop.permute.xlu0 %71
  %75 = vset.pattern.permute.xlu0 0
  %76 = vperm.xlu0 %75, %v42
  %v77 = vpop.permute.xlu0 %76
  %80 = vset.pattern.permute.xlu0 0
  %81 = vperm.xlu0 %80, %v43
  %v82 = vpop.permute.xlu0 %81
  %v92 = vunpack.c.l.b16 %v28
  %v93 = vunpack.c.l.b16 %v29
  %v94 = vunpack.c.l.b16 %v30
  %v95 = vunpack.c.l.b16 %v31
  %v96 = vunpack.c.l.b16 %v32
  %v97 = vunpack.c.l.b16 %v33
  %v98 = vunpack.c.l.b16 %v34
  %v99 = vunpack.c.l.b16 %v35
  %v100 = vpack.c.b16 %v93, %v92
  %v101 = vpack.c.b16 %v95, %v94
  %v102 = vpack.c.b16 %v97, %v96
  %v103 = vpack.c.b16 %v99, %v98
  %vm104 = vcmask 64512
  %v106 = vsel %vm104, %v100, 0
  %v109 = vsel %vm104, %v101, 0
  %v112 = vsel %vm104, %v102, 0
  %v115 = vsel %vm104, %v103, 0
  %vm117 = vcmask 1043456
  %v119 = vsel %vm117, %v27, 0
  %121 = vmatprep.subr.bf16.mxu0 0
  %122 = vmatpush1.bf16.msra.mxu0 0
  %123 = vmatprep.subr.bf16.mxu0 0
  %124 = vmatpush1.bf16.msra.mxu0 0
  %125 = vmatprep.subr.bf16.mxu0 0
  %126 = vmatpush1.bf16.msra.mxu0 0
  %127 = vmatprep.subr.bf16.mxu0 0
  %128 = vmatpush1.bf16.msra.mxu0 0
  %129 = vmatprep.subr.bf16.mxu0 0
  %130 = vmatpush1.bf16.msra.mxu0 0
  %131 = vmatprep.subr.bf16.mxu0 0
  %132 = vmatpush1.bf16.msra.mxu0 0
  %133 = vmatprep.subr.bf16.mxu0 0
  %134 = vmatpush1.bf16.msra.mxu0 0
  %135 = vmatprep.subr.bf16.mxu0 0
  %136 = vmatpush1.bf16.msra.mxu0 %v119
  %137 = vmatprep.subr.bf16.mxu0 0
  %138 = vmatpush2.bf16.msra.mxu0 0
  %139 = vmatprep.subr.bf16.mxu0 0
  %140 = vmatpush2.bf16.msra.mxu0 0
  %141 = vmatprep.subr.bf16.mxu0 0
  %142 = vmatpush2.bf16.msra.mxu0 0
  %143 = vmatprep.subr.bf16.mxu0 0
  %144 = vmatpush2.bf16.msra.mxu0 0
  %145 = vmatprep.subr.bf16.mxu0 0
  %146 = vmatpush2.bf16.msra.mxu0 0
  %147 = vmatprep.subr.bf16.mxu0 0
  %148 = vmatpush2.bf16.msra.mxu0 0
  %149 = vmatprep.subr.bf16.mxu0 0
  %150 = vmatpush2.bf16.msra.mxu0 0
  %151 = vmatprep.subr.bf16.mxu0 0
  %152 = vmatpush2.bf16.msra.mxu0 0
  %153 = vmatprep.mubr.bf16.mxu0 0
  %154 = vmatmul.mubr.bf16.gmra.mxu0 %v106
  %v155 = vpop.f32.mrf.mxu0
  %v156 = vadd.f32 %v47, %v155
  %v157 = vpop.f32.mrf.mxu0
  %v158 = vpop.f32.mrf.mxu0
  %v159 = vadd.f32 %v52, %v158
  %v160 = vpop.f32.mrf.mxu0
  %161 = vmatprep.mubr.bf16.mxu0 0
  %162 = vmatmul.mubr.bf16.gmra.mxu0 %v109
  %v163 = vpop.f32.mrf.mxu0
  %v164 = vadd.f32 %v57, %v163
  %v165 = vpop.f32.mrf.mxu0
  %v166 = vpop.f32.mrf.mxu0
  %v167 = vadd.f32 %v62, %v166
  %v168 = vpop.f32.mrf.mxu0
  %169 = vmatprep.mubr.bf16.mxu0 0
  %170 = vmatmul.mubr.bf16.gmra.mxu0 %v112
  %v171 = vpop.f32.mrf.mxu0
  %v172 = vadd.f32 %v67, %v171
  %v173 = vpop.f32.mrf.mxu0
  %v174 = vpop.f32.mrf.mxu0
  %v175 = vadd.f32 %v72, %v174
  %v176 = vpop.f32.mrf.mxu0
  %177 = vmatprep.mubr.bf16.mxu0 0
  %178 = vmatmul.mubr.bf16.gmra.mxu0 %v115
  %v179 = vpop.f32.mrf.mxu0
  %v180 = vadd.f32 %v77, %v179
  %v181 = vpop.f32.mrf.mxu0
  %v182 = vpop.f32.mrf.mxu0
  %v183 = vadd.f32 %v82, %v182
  %v184 = vpop.f32.mrf.mxu0
  %185 = vdwg.mxu0
  %v186 = vmax.f32 %v156, 0.0
  %v187 = vmax.f32 %v159, 0.0
  %v188 = vmax.f32 %v164, 0.0
  %v189 = vmax.f32 %v167, 0.0
  %v190 = vmax.f32 %v172, 0.0
  %v191 = vmax.f32 %v175, 0.0
  %v192 = vmax.f32 %v180, 0.0
  %v193 = vmax.f32 %v183, 0.0
  %v194 = vld [vmem:[%s3] sm:$0xf]
  %v195 = vld [vmem:[%s3 + $0x4] sm:$0xf]
  %v196 = vld [vmem:[%s3 + $0x8] sm:$0xf]
  %v197 = vld [vmem:[%s3 + $0xc] sm:$0xf]
  %v198 = vld [vmem:[%s3 + $0x10] sm:$0xf]
  %v199 = vld [vmem:[%s3 + $0x14] sm:$0xf]
  %v200 = vld [vmem:[%s3 + $0x18] sm:$0xf]
  %v201 = vld [vmem:[%s3 + $0x1c] sm:$0xf]
  %v202 = vpack.c.bf16 %v187, %v186
  %v203 = vpack.c.bf16 %v189, %v188
  %v204 = vpack.c.bf16 %v191, %v190
  %v205 = vpack.c.bf16 %v193, %v192
  %v206 = vld [vmem:[%s4] sm:$0xff]
  %v207 = vld [vmem:[%s4 + $0x8] sm:$0xff]
  %v208 = vld [vmem:[%s4 + $0x10] sm:$0xff]
  %v209 = vld [vmem:[%s4 + $0x18] sm:$0xff]
  %v210 = vld [vmem:[%s4 + $0x20] sm:$0xff]
  %v211 = vld [vmem:[%s4 + $0x28] sm:$0xff]
  %v212 = vld [vmem:[%s4 + $0x30] sm:$0xff]
  %v213 = vld [vmem:[%s4 + $0x38] sm:$0xff]
  %215 = vset.pattern.permute.xlu0 0
  %216 = vperm.xlu0 %215, %v206
  %v217 = vpop.permute.xlu0 %216
  %220 = vset.pattern.permute.xlu0 0
  %221 = vperm.xlu0 %220, %v207
  %v222 = vpop.permute.xlu0 %221
  %225 = vset.pattern.permute.xlu0 0
  %226 = vperm.xlu0 %225, %v208
  %v227 = vpop.permute.xlu0 %226
  %230 = vset.pattern.permute.xlu0 0
  %231 = vperm.xlu0 %230, %v209
  %v232 = vpop.permute.xlu0 %231
  %235 = vset.pattern.permute.xlu0 0
  %236 = vperm.xlu0 %235, %v210
  %v237 = vpop.permute.xlu0 %236
  %240 = vset.pattern.permute.xlu0 0
  %241 = vperm.xlu0 %240, %v211
  %v242 = vpop.permute.xlu0 %241
  %245 = vset.pattern.permute.xlu0 0
  %246 = vperm.xlu0 %245, %v212
  %v247 = vpop.permute.xlu0 %246
  %250 = vset.pattern.permute.xlu0 0
  %251 = vperm.xlu0 %250, %v213
  %v252 = vpop.permute.xlu0 %251
  %v262 = vunpack.c.l.b16 %v194
  %v263 = vunpack.c.l.b16 %v195
  %v264 = vunpack.c.l.b16 %v196
  %v265 = vunpack.c.l.b16 %v197
  %v266 = vunpack.c.l.b16 %v198
  %v267 = vunpack.c.l.b16 %v199
  %v268 = vunpack.c.l.b16 %v200
  %v269 = vunpack.c.l.b16 %v201
  %v270 = vpack.c.b16 %v263, %v262
  %v271 = vpack.c.b16 %v265, %v264
  %v272 = vpack.c.b16 %v267, %v266
  %v273 = vpack.c.b16 %v269, %v268
  %vm274 = vcmask 523264
  %v276 = vsel %vm274, %v270, 0
  %v279 = vsel %vm274, %v271, 0
  %v282 = vsel %vm274, %v272, 0
  %v285 = vsel %vm274, %v273, 0
  %287 = vmatprep.subr.bf16.mxu0 0
  %288 = vmatpush1.bf16.msra.mxu0 0
  %289 = vmatprep.subr.bf16.mxu0 0
  %290 = vmatpush1.bf16.msra.mxu0 0
  %291 = vmatprep.subr.bf16.mxu0 0
  %292 = vmatpush1.bf16.msra.mxu0 0
  %293 = vmatprep.subr.bf16.mxu0 0
  %294 = vmatpush1.bf16.msra.mxu0 0
  %295 = vmatprep.subr.bf16.mxu0 0
  %296 = vmatpush1.bf16.msra.mxu0 %v205
  %297 = vmatprep.subr.bf16.mxu0 0
  %298 = vmatpush1.bf16.msra.mxu0 %v204
  %299 = vmatprep.subr.bf16.mxu0 0
  %300 = vmatpush1.bf16.msra.mxu0 %v203
  %301 = vmatprep.subr.bf16.mxu0 0
  %302 = vmatpush1.bf16.msra.mxu0 %v202
  %303 = vmatprep.subr.bf16.mxu0 0
  %304 = vmatpush2.bf16.msra.mxu0 0
  %305 = vmatprep.subr.bf16.mxu0 0
  %306 = vmatpush2.bf16.msra.mxu0 0
  %307 = vmatprep.subr.bf16.mxu0 0
  %308 = vmatpush2.bf16.msra.mxu0 0
  %309 = vmatprep.subr.bf16.mxu0 0
  %310 = vmatpush2.bf16.msra.mxu0 0
  %311 = vmatprep.subr.bf16.mxu0 0
  %312 = vmatpush2.bf16.msra.mxu0 0
  %313 = vmatprep.subr.bf16.mxu0 0
  %314 = vmatpush2.bf16.msra.mxu0 0
  %315 = vmatprep.subr.bf16.mxu0 0
  %316 = vmatpush2.bf16.msra.mxu0 0
  %317 = vmatprep.subr.bf16.mxu0 0
  %318 = vmatpush2.bf16.msra.mxu0 0
  %319 = vmatprep.mubr.bf16.mxu0 0
  %320 = vmatmul.mubr.bf16.gmra.mxu0 %v276
  %v321 = vpop.f32.mrf.mxu0
  %v322 = vadd.f32 %v217, %v321
  %v323 = vpop.f32.mrf.mxu0
  %v324 = vpop.f32.mrf.mxu0
  %v325 = vadd.f32 %v222, %v324
  %v326 = vpop.f32.mrf.mxu0
  %327 = vmatprep.mubr.bf16.mxu0 0
  %328 = vmatmul.mubr.bf16.gmra.mxu0 %v279
  %v329 = vpop.f32.mrf.mxu0
  %v330 = vadd.f32 %v227, %v329
  %v331 = vpop.f32.mrf.mxu0
  %v332 = vpop.f32.mrf.mxu0
  %v333 = vadd.f32 %v232, %v332
  %v334 = vpop.f32.mrf.mxu0
  %335 = vmatprep.mubr.bf16.mxu0 0
  %336 = vmatmul.mubr.bf16.gmra.mxu0 %v282
  %v337 = vpop.f32.mrf.mxu0
  %v338 = vadd.f32 %v237, %v337
  %v339 = vpop.f32.mrf.mxu0
  %v340 = vpop.f32.mrf.mxu0
  %v341 = vadd.f32 %v242, %v340
  %v342 = vpop.f32.mrf.mxu0
  %343 = vmatprep.mubr.bf16.mxu0 0
  %344 = vmatmul.mubr.bf16.gmra.mxu0 %v285
  %v345 = vpop.f32.mrf.mxu0
  %v346 = vadd.f32 %v247, %v345
  %v347 = vpop.f32.mrf.mxu0
  %v348 = vpop.f32.mrf.mxu0
  %v349 = vadd.f32 %v252, %v348
  %v350 = vpop.f32.mrf.mxu0
  %351 = vdwg.mxu0
  %v352 = vmax.f32 %v322, 0.0
  %v353 = vmax.f32 %v325, 0.0
  %v354 = vmax.f32 %v330, 0.0
  %v355 = vmax.f32 %v333, 0.0
  %v356 = vmax.f32 %v338, 0.0
  %v357 = vmax.f32 %v341, 0.0
  %v358 = vmax.f32 %v346, 0.0
  %v359 = vmax.f32 %v349, 0.0
  %v360 = vld [vmem:[%s5] sm:$0x3]
  %v361 = vpack.c.bf16 %v353, %v352
  %v362 = vpack.c.bf16 %v355, %v354
  %v363 = vpack.c.bf16 %v357, %v356
  %v364 = vpack.c.bf16 %v359, %v358
  %v365 = vld [vmem:[%s6] sm:$0xf]
  %367 = vset.pattern.permute.xlu0 0
  %368 = vperm.xlu0 %367, %v365
  %v369 = vpop.permute.xlu0 %368
  %v372 = vsel %vm274, %v360, 0
  %374 = vmatprep.subr.bf16.mxu0 0
  %375 = vmatpush1.bf16.msra.mxu0 0
  %376 = vmatprep.subr.bf16.mxu0 0
  %377 = vmatpush1.bf16.msra.mxu0 0
  %378 = vmatprep.subr.bf16.mxu0 0
  %379 = vmatpush1.bf16.msra.mxu0 0
  %380 = vmatprep.subr.bf16.mxu0 0
  %381 = vmatpush1.bf16.msra.mxu0 0
  %382 = vmatprep.subr.bf16.mxu0 0
  %383 = vmatpush1.bf16.msra.mxu0 %v364
  %384 = vmatprep.subr.bf16.mxu0 0
  %385 = vmatpush1.bf16.msra.mxu0 %v363
  %386 = vmatprep.subr.bf16.mxu0 0
  %387 = vmatpush1.bf16.msra.mxu0 %v362
  %388 = vmatprep.subr.bf16.mxu0 0
  %389 = vmatpush1.bf16.msra.mxu0 %v361
  %390 = vmatprep.subr.bf16.mxu0 0
  %391 = vmatpush2.bf16.msra.mxu0 0
  %392 = vmatprep.subr.bf16.mxu0 0
  %393 = vmatpush2.bf16.msra.mxu0 0
  %394 = vmatprep.subr.bf16.mxu0 0
  %395 = vmatpush2.bf16.msra.mxu0 0
  %396 = vmatprep.subr.bf16.mxu0 0
  %397 = vmatpush2.bf16.msra.mxu0 0
  %398 = vmatprep.subr.bf16.mxu0 0
  %399 = vmatpush2.bf16.msra.mxu0 0
  %400 = vmatprep.subr.bf16.mxu0 0
  %401 = vmatpush2.bf16.msra.mxu0 0
  %402 = vmatprep.subr.bf16.mxu0 0
  %403 = vmatpush2.bf16.msra.mxu0 0
  %404 = vmatprep.subr.bf16.mxu0 0
  %405 = vmatpush2.bf16.msra.mxu0 0
  %406 = vmatprep.mubr.bf16.mxu0 0
  %407 = vmatmul.mubr.bf16.gmra.mxu0 %v372
  %v408 = vpop.f32.mrf.mxu0
  %v409 = vadd.f32 %v369, %v408
  %v410 = vpop.f32.mrf.mxu0
  %v411 = vpop.f32.mrf.mxu0
  %v412 = vpop.f32.mrf.mxu0
  %413 = vdwg.mxu0
  %v414 = vtanh.pop %v409
  %vm415 = vcmask 11264
  %416 = vst.msk [vmem:[%s7] sm:$0xf] %vm415, %v414
  // Predicated region
  $region30: #{tpu_custom_call.1} parent=0 // pred_check
    _
  $region31: #{tpu_custom_call.1} parent=0 // pred_check_branch
    %418 = sbr.rel (0) target = $region33
  $region32: #{tpu_custom_call.1} parent=0 // pred_region
    _
  $region33: #{tpu_custom_call.1} parent=0 // pred_fallthru
    _
  // Predicated region
  $region34: #{tpu_custom_call.1} parent=0 // pred_check
    _
  $region35: #{tpu_custom_call.1} parent=0 // pred_check_branch
    %420 = sbr.rel (0) target = $region37
  $region36: #{tpu_custom_call.1} parent=0 // pred_region
    _
  $region37: #{tpu_custom_call.1} parent=0 // pred_fallthru
    _

</llo_original>
